<compile_context>
chip_gen: v5e
topology: v5e:2x2
jax: 0.10.0
libtpu: 0.0.40
codegen_flags: <defaults>
</compile_context>

<pallas_src>
import jax
import jax.numpy as jnp
from jax.experimental import pallas as pl
from jax.experimental.pallas import tpu as pltpu

HIDDEN = 50
LANE = 128  # lane width / padded feature size


def _round_up(n, m):
    return ((n + m - 1) // m) * m


def _mlp_kernel(x_ref, w1_ref, wr_ref, b_ref, out_ref):
    # x_ref:   (TB, IN_PAD)    f32 activation tile (zero padded features)
    # w1_ref:  (IN_PAD, 128)   layer-1 weight, zero padded
    # wr_ref:  (4, 128, 128)   layers 2..5 weights, zero padded
    # b_ref:   (5, 1, 128)     all biases, zero padded
    # out_ref: (TB, 128)       lane-dense output tile (real cols sliced outside)
    h = jnp.maximum(
        jnp.dot(x_ref[...], w1_ref[...], preferred_element_type=jnp.float32)
        + b_ref[0],
        0.0)
    for i in range(3):  # hidden layers 2..4 (static unroll)
        h = jnp.maximum(
            jnp.dot(h, wr_ref[i], preferred_element_type=jnp.float32)
            + b_ref[i + 1],
            0.0)
    out_ref[...] = (
        jnp.dot(h, wr_ref[3], preferred_element_type=jnp.float32) + b_ref[4]
    ).astype(out_ref.dtype)


def pack_params(params, input_size):
    """Pack the 5 (W[in,out], b[1,out]) pairs into padded lane-aligned slabs."""
    out_size = params[-1][0].shape[1]
    in_pad = _round_up(max(input_size, LANE), LANE)

    w1 = jnp.zeros((in_pad, LANE), jnp.float32)
    w1 = w1.at[:input_size, :HIDDEN].set(params[0][0].astype(jnp.float32))

    wr = jnp.zeros((4, LANE, LANE), jnp.float32)
    for i in range(1, 4):  # hidden layers 2..4
        wr = wr.at[i - 1, :HIDDEN, :HIDDEN].set(params[i][0].astype(jnp.float32))
    wr = wr.at[3, :HIDDEN, :out_size].set(params[4][0].astype(jnp.float32))

    b = jnp.zeros((5, 1, LANE), jnp.float32)
    for i in range(4):
        b = b.at[i, 0, :HIDDEN].set(params[i][1].reshape(-1).astype(jnp.float32))
    b = b.at[4, 0, :out_size].set(params[4][1].reshape(-1).astype(jnp.float32))
    return w1, wr, b


def sleep_model_forward(x, params):
    """x: [batch, input_size]. params: list of 5 (W[in,out], b[1,out])."""
    batch, input_size = x.shape
    out_size = params[-1][0].shape[1]

    w1, wr, b = pack_params(params, input_size)
    in_pad = w1.shape[0]

    # Batch tile: multiple of 8 sublanes, capped at 512 rows (VMEM-safe on v7x).
    tb = 512 if batch >= 512 else _round_up(batch, 8)
    batch_pad = _round_up(batch, tb)

    x_p = jnp.zeros((batch_pad, in_pad), jnp.float32)
    x_p = x_p.at[:batch, :input_size].set(x.astype(jnp.float32))

    grid = (batch_pad // tb,)
    out_p = pl.pallas_call(
        _mlp_kernel,
        out_shape=jax.ShapeDtypeStruct((batch_pad, LANE), jnp.float32),
        grid=grid,
        in_specs=[
            pl.BlockSpec((tb, in_pad), lambda i: (i, 0)),        # activations
            pl.BlockSpec((in_pad, LANE), lambda i: (0, 0)),      # W1 (resident)
            pl.BlockSpec((4, LANE, LANE), lambda i: (0, 0, 0)),  # W2..W5 slab
            pl.BlockSpec((5, 1, LANE), lambda i: (0, 0, 0)),     # biases slab
        ],
        out_specs=pl.BlockSpec((tb, LANE), lambda i: (i, 0)),    # lane-dense
        compiler_params=pltpu.CompilerParams(
            dimension_semantics=("parallel",)),
    )(x_p, w1, wr, b)

    return out_p[:batch, :out_size].astype(x.dtype)


def init_params(key, input_size, output_size):
    """Deterministic init mimicking nn.Linear default (uniform ±1/sqrt(fan_in))."""
    dims = [(input_size, HIDDEN), (HIDDEN, HIDDEN), (HIDDEN, HIDDEN),
            (HIDDEN, HIDDEN), (HIDDEN, output_size)]
    params = []
    for i, (fan_in, fan_out) in enumerate(dims):
        kw, kb = jax.random.split(jax.random.fold_in(key, i))
        bound = 1.0 / (fan_in ** 0.5)
        w = jax.random.uniform(kw, (fan_in, fan_out), jnp.float32, -bound, bound)
        bb = jax.random.uniform(kb, (1, fan_out), jnp.float32, -bound, bound)
        params.append((w, bb))
    return params


def reference_forward(x, params):
    h = x
    for i, (w, bb) in enumerate(params):
        h = h @ w + bb
        if i < len(params) - 1:
            h = jnp.maximum(h, 0.0)
    return h


if __name__ == "__main__":
    key = jax.random.PRNGKey(0)
    batch, input_size, output_size = 8, 16, 4

    params = init_params(key, input_size, output_size)
    x = jax.random.normal(jax.random.fold_in(key, 100),
                          (batch, input_size), jnp.float32)

    out = sleep_model_forward(x, params)
    out = jax.block_until_ready(out)

    ref = reference_forward(x, params)
    assert out.shape == (batch, output_size)
    assert jnp.allclose(out, ref, atol=1e-4, rtol=1e-4), "mismatch vs reference"

    print("KERNEL_OK")
</pallas_src>

<mosaic_0001>
module attributes {stable_mosaic.version = 11 : i64} {
  func.func @_mlp_kernel(%arg0: i32, %arg1: memref<8x128xf32, #tpu.memory_space<vmem>>, %arg2: memref<128x128xf32, #tpu.memory_space<vmem>>, %arg3: memref<4x128x128xf32, #tpu.memory_space<vmem>>, %arg4: memref<5x1x128xf32, #tpu.memory_space<vmem>>, %arg5: memref<8x128xf32, #tpu.memory_space<vmem>>) attributes {dimension_semantics = [#tpu.dimension_semantics<parallel>], iteration_bounds = array<i64: 1>, scalar_prefetch = 0 : i64, scratch_operands = 0 : i64, tpu.core_type = #tpu.core_type<tc>, window_params = [{transform_indices = @transform_0, window_bounds = array<i64: 8, 128>}, {pipeline_mode = #tpu.pipeline_mode<synchronous>, transform_indices = @transform_1, window_bounds = array<i64: 128, 128>}, {pipeline_mode = #tpu.pipeline_mode<synchronous>, transform_indices = @transform_2, window_bounds = array<i64: 4, 128, 128>}, {pipeline_mode = #tpu.pipeline_mode<synchronous>, transform_indices = @transform_3, window_bounds = array<i64: 5, 1, 128>}, {transform_indices = @transform_4, window_bounds = array<i64: 8, 128>}]} {
    %c0 = arith.constant 0 : index
    %c0_0 = arith.constant 0 : index
    %0 = vector.load %arg1[%c0, %c0_0] : memref<8x128xf32, #tpu.memory_space<vmem>>, vector<8x128xf32>
    %c0_1 = arith.constant 0 : index
    %c0_2 = arith.constant 0 : index
    %1 = vector.load %arg2[%c0_1, %c0_2] : memref<128x128xf32, #tpu.memory_space<vmem>>, vector<128x128xf32>
    %cst = arith.constant dense<0.000000e+00> : vector<8x128xf32>
    %2 = tpu.matmul %0, %1, %cst {dimension_numbers = #tpu.dot_dimension_numbers<[1], [0], [0], [1], [0, 0, 1, 1], [], []>} : vector<8x128xf32>, vector<128x128xf32>, vector<8x128xf32> -> vector<8x128xf32>
    %c0_3 = arith.constant 0 : index
    %c0_4 = arith.constant 0 : index
    %c0_5 = arith.constant 0 : index
    %3 = vector.load %arg4[%c0_3, %c0_4, %c0_5] : memref<5x1x128xf32, #tpu.memory_space<vmem>>, vector<1x1x128xf32>
    %4 = vector.shape_cast %3 : vector<1x1x128xf32> to vector<1x128xf32>
    %5 = vector.broadcast %4 : vector<1x128xf32> to vector<8x128xf32>
    %6 = arith.addf %2, %5 : vector<8x128xf32>
    %cst_6 = arith.constant 0.000000e+00 : f32
    %7 = vector.broadcast %cst_6 : f32 to vector<8x128xf32>
    %8 = arith.maximumf %6, %7 : vector<8x128xf32>
    %c0_7 = arith.constant 0 : index
    %c0_8 = arith.constant 0 : index
    %c0_9 = arith.constant 0 : index
    %9 = vector.load %arg3[%c0_7, %c0_8, %c0_9] : memref<4x128x128xf32, #tpu.memory_space<vmem>>, vector<1x128x128xf32>
    %10 = vector.shape_cast %9 : vector<1x128x128xf32> to vector<128x128xf32>
    %cst_10 = arith.constant dense<0.000000e+00> : vector<8x128xf32>
    %11 = tpu.matmul %8, %10, %cst_10 {dimension_numbers = #tpu.dot_dimension_numbers<[1], [0], [0], [1], [0, 0, 1, 1], [], []>} : vector<8x128xf32>, vector<128x128xf32>, vector<8x128xf32> -> vector<8x128xf32>
    %c1 = arith.constant 1 : index
    %c0_11 = arith.constant 0 : index
    %c0_12 = arith.constant 0 : index
    %12 = vector.load %arg4[%c1, %c0_11, %c0_12] : memref<5x1x128xf32, #tpu.memory_space<vmem>>, vector<1x1x128xf32>
    %13 = vector.shape_cast %12 : vector<1x1x128xf32> to vector<1x128xf32>
    %14 = vector.broadcast %13 : vector<1x128xf32> to vector<8x128xf32>
    %15 = arith.addf %11, %14 : vector<8x128xf32>
    %cst_13 = arith.constant 0.000000e+00 : f32
    %16 = vector.broadcast %cst_13 : f32 to vector<8x128xf32>
    %17 = arith.maximumf %15, %16 : vector<8x128xf32>
    %c1_14 = arith.constant 1 : index
    %c0_15 = arith.constant 0 : index
    %c0_16 = arith.constant 0 : index
    %18 = vector.load %arg3[%c1_14, %c0_15, %c0_16] : memref<4x128x128xf32, #tpu.memory_space<vmem>>, vector<1x128x128xf32>
    %19 = vector.shape_cast %18 : vector<1x128x128xf32> to vector<128x128xf32>
    %cst_17 = arith.constant dense<0.000000e+00> : vector<8x128xf32>
    %20 = tpu.matmul %17, %19, %cst_17 {dimension_numbers = #tpu.dot_dimension_numbers<[1], [0], [0], [1], [0, 0, 1, 1], [], []>} : vector<8x128xf32>, vector<128x128xf32>, vector<8x128xf32> -> vector<8x128xf32>
    %c2 = arith.constant 2 : index
    %c0_18 = arith.constant 0 : index
    %c0_19 = arith.constant 0 : index
    %21 = vector.load %arg4[%c2, %c0_18, %c0_19] : memref<5x1x128xf32, #tpu.memory_space<vmem>>, vector<1x1x128xf32>
    %22 = vector.shape_cast %21 : vector<1x1x128xf32> to vector<1x128xf32>
    %23 = vector.broadcast %22 : vector<1x128xf32> to vector<8x128xf32>
    %24 = arith.addf %20, %23 : vector<8x128xf32>
    %cst_20 = arith.constant 0.000000e+00 : f32
    %25 = vector.broadcast %cst_20 : f32 to vector<8x128xf32>
    %26 = arith.maximumf %24, %25 : vector<8x128xf32>
    %c2_21 = arith.constant 2 : index
    %c0_22 = arith.constant 0 : index
    %c0_23 = arith.constant 0 : index
    %27 = vector.load %arg3[%c2_21, %c0_22, %c0_23] : memref<4x128x128xf32, #tpu.memory_space<vmem>>, vector<1x128x128xf32>
    %28 = vector.shape_cast %27 : vector<1x128x128xf32> to vector<128x128xf32>
    %cst_24 = arith.constant dense<0.000000e+00> : vector<8x128xf32>
    %29 = tpu.matmul %26, %28, %cst_24 {dimension_numbers = #tpu.dot_dimension_numbers<[1], [0], [0], [1], [0, 0, 1, 1], [], []>} : vector<8x128xf32>, vector<128x128xf32>, vector<8x128xf32> -> vector<8x128xf32>
    %c3 = arith.constant 3 : index
    %c0_25 = arith.constant 0 : index
    %c0_26 = arith.constant 0 : index
    %30 = vector.load %arg4[%c3, %c0_25, %c0_26] : memref<5x1x128xf32, #tpu.memory_space<vmem>>, vector<1x1x128xf32>
    %31 = vector.shape_cast %30 : vector<1x1x128xf32> to vector<1x128xf32>
    %32 = vector.broadcast %31 : vector<1x128xf32> to vector<8x128xf32>
    %33 = arith.addf %29, %32 : vector<8x128xf32>
    %cst_27 = arith.constant 0.000000e+00 : f32
    %34 = vector.broadcast %cst_27 : f32 to vector<8x128xf32>
    %35 = arith.maximumf %33, %34 : vector<8x128xf32>
    %c3_28 = arith.constant 3 : index
    %c0_29 = arith.constant 0 : index
    %c0_30 = arith.constant 0 : index
    %36 = vector.load %arg3[%c3_28, %c0_29, %c0_30] : memref<4x128x128xf32, #tpu.memory_space<vmem>>, vector<1x128x128xf32>
    %37 = vector.shape_cast %36 : vector<1x128x128xf32> to vector<128x128xf32>
    %cst_31 = arith.constant dense<0.000000e+00> : vector<8x128xf32>
    %38 = tpu.matmul %35, %37, %cst_31 {dimension_numbers = #tpu.dot_dimension_numbers<[1], [0], [0], [1], [0, 0, 1, 1], [], []>} : vector<8x128xf32>, vector<128x128xf32>, vector<8x128xf32> -> vector<8x128xf32>
    %c4 = arith.constant 4 : index
    %c0_32 = arith.constant 0 : index
    %c0_33 = arith.constant 0 : index
    %39 = vector.load %arg4[%c4, %c0_32, %c0_33] : memref<5x1x128xf32, #tpu.memory_space<vmem>>, vector<1x1x128xf32>
    %40 = vector.shape_cast %39 : vector<1x1x128xf32> to vector<1x128xf32>
    %41 = vector.broadcast %40 : vector<1x128xf32> to vector<8x128xf32>
    %42 = arith.addf %38, %41 : vector<8x128xf32>
    %c0_34 = arith.constant 0 : index
    %c0_35 = arith.constant 0 : index
    %43 = vector.load %arg5[%c0_34, %c0_35] : memref<8x128xf32, #tpu.memory_space<vmem>>, vector<8x128xf32>
    tpu.vector_store %arg5[%c0_34, %c0_35], %42 {strides = array<i32>} : memref<8x128xf32, #tpu.memory_space<vmem>>, vector<8x128xf32>,
    return
  }
  func.func @transform_0(%arg0: i32) -> (i32, i32) {
    %c0_i32 = arith.constant 0 : i32
    %c0_i32_0 = arith.constant 0 : i32
    return %arg0, %c0_i32 : i32, i32
  }
  func.func @transform_1(%arg0: i32) -> (i32, i32) {
    %c0_i32 = arith.constant 0 : i32
    %c0_i32_0 = arith.constant 0 : i32
    %c0_i32_1 = arith.constant 0 : i32
    return %c0_i32, %c0_i32_0 : i32, i32
  }
  func.func @transform_2(%arg0: i32) -> (i32, i32, i32) {
    %c0_i32 = arith.constant 0 : i32
    %c0_i32_0 = arith.constant 0 : i32
    %c0_i32_1 = arith.constant 0 : i32
    %c0_i32_2 = arith.constant 0 : i32
    return %c0_i32, %c0_i32_0, %c0_i32_1 : i32, i32, i32
  }
  func.func @transform_3(%arg0: i32) -> (i32, i32, i32) {
    %c0_i32 = arith.constant 0 : i32
    %c0_i32_0 = arith.constant 0 : i32
    %c0_i32_1 = arith.constant 0 : i32
    %c0_i32_2 = arith.constant 0 : i32
    return %c0_i32, %c0_i32_0, %c0_i32_1 : i32, i32, i32
  }
  func.func @transform_4(%arg0: i32) -> (i32, i32) {
    %c0_i32 = arith.constant 0 : i32
    %c0_i32_0 = arith.constant 0 : i32
    return %arg0, %c0_i32 : i32, i32
  }
}

</mosaic_0001>

<llo_original>
// kernel: tpu_custom_call.1
$region0: #{tpu_custom_call.1}
  #allocation0 [shape = 'u32[]', space=smem, size = 0x4, offset = 0x4, fixed_abs, tag = 'smem constant byte address 0x4 - core index']
  #allocation1 [shape = 'u32[72,128]{1,0:T(1,128)}', space=vmem, size = 0x9000, scoped, tag = 'internal scratch']
  %s0 = inlined_call_operand.hbm [shape: f32[8,128], index: 0, kind: input, shape index: {}]
  %s1 = inlined_call_operand.hbm [shape: f32[128,128], index: 1, kind: input, shape index: {}]
  %s2 = inlined_call_operand.hbm [shape: f32[4,128,128], index: 2, kind: input, shape index: {}]
  %s3 = inlined_call_operand.hbm [shape: f32[5,1,128], index: 3, kind: input, shape index: {}]
  %s4 = inlined_call_operand.hbm [shape: f32[8,128], index: 4, kind: output, shape index: {}]
  %s5 = sld [smem:[#allocation0]]
  $region42: #{tpu_custom_call.1} parent=0
    _
  %s7 = ssub.s32 1, %s5
  %s8 = scalar_select 0, %s7, %s5
  $region1: #{tpu_custom_call.1} parent=0
    #allocation2 [shape = 'u8[4096]{0}', space=vmem, size = 0x1000, scoped, tag = 'input window, operand 0, single buffered']
    #allocation3 [shape = 's32[1]{0}', space=sflag, size = 0x4, scoped, tag = 'scoped memory for tpu_custom_call.1']
    #allocation4 [shape = 's32[1]{0}', space=sflag, size = 0x4, scoped, tag = 'scoped memory for tpu_custom_call.1']
    #allocation5 [shape = 'u8[65536]{0}', space=vmem, size = 0x10000, scoped, tag = 'input window, operand 1, single buffered']
    #allocation6 [shape = 's32[1]{0}', space=sflag, size = 0x4, scoped, tag = 'scoped memory for tpu_custom_call.1']
    #allocation7 [shape = 'u8[262144]{0}', space=vmem, size = 0x40000, scoped, tag = 'input window, operand 2, single buffered']
    #allocation8 [shape = 'u8[2560]{0}', space=vmem, size = 0xc00, scoped, tag = 'input window, operand 3, single buffered']
    #allocation9 [shape = 's32[1]{0}', space=sflag, size = 0x4, scoped, tag = 'scoped memory for tpu_custom_call.1']
    #allocation10 [shape = 'u8[4096]{0}', space=vmem, size = 0x1000, scoped, tag = 'output window, operand 0, single buffered']
    %9 = vsyncpa [#allocation3], 0
    %10 = vsyncpa [#allocation6], 0
    %11 = vsyncpa [#allocation9], 0
    %12 = vsyncpa [#allocation4], 0
    // Predicated region
    $region2: #{tpu_custom_call.1} parent=1 // pred_check
      _
    $region3: #{tpu_custom_call.1} parent=1 // pred_check_branch
      %14 = sbr.rel (0) target = $region5
    $region4: #{tpu_custom_call.1} parent=1 // pred_region
      %16 = vsyncadd [#allocation3], 0
      %s18 = sshll.u32 %s0, 4
      %s19 = int_to_ptr.hbm [resolvable:$true] %s18
      %s20 = sshll.u32 [#allocation2], 4
      %s21 = int_to_ptr.vmem [resolvable:$true] %s20
      %23 = dma.hbm_to_vmem [thread:$0]  %s19, 128, %s21, [#allocation3]
    $region5: #{tpu_custom_call.1} parent=1 // pred_fallthru
      _
    // Predicated region
    $region6: #{tpu_custom_call.1} parent=1 // pred_check
      _
    $region7: #{tpu_custom_call.1} parent=1 // pred_check_branch
      %25 = sbr.rel (0) target = $region9
    $region8: #{tpu_custom_call.1} parent=1 // pred_region
      %27 = vsyncadd [#allocation6], 0
      %s28 = sshll.u32 %s1, 4
      %s29 = int_to_ptr.hbm [resolvable:$true] %s28
      %s30 = sshll.u32 [#allocation5], 4
      %s31 = int_to_ptr.vmem [resolvable:$true] %s30
      %36 = dma.hbm_to_vmem [thread:$0]  %s29, 2048, %s31, [#allocation6], 128, 128, 8
    $region9: #{tpu_custom_call.1} parent=1 // pred_fallthru
      _
    // Predicated region
    $region10: #{tpu_custom_call.1} parent=1 // pred_check
      _
    $region11: #{tpu_custom_call.1} parent=1 // pred_check_branch
      %38 = sbr.rel (0) target = $region13
    $region12: #{tpu_custom_call.1} parent=1 // pred_region
      %40 = vsyncadd [#allocation6], 0
      %s41 = sshll.u32 %s2, 4
      %s42 = int_to_ptr.hbm [resolvable:$true] %s41
      %s43 = sshll.u32 [#allocation7], 4
      %s44 = int_to_ptr.vmem [resolvable:$true] %s43
      %49 = dma.hbm_to_vmem [thread:$0]  %s42, 8192, %s44, [#allocation6], 128, 128, 8
    $region13: #{tpu_custom_call.1} parent=1 // pred_fallthru
      _
    // Predicated region
    $region14: #{tpu_custom_call.1} parent=1 // pred_check
      _
    $region15: #{tpu_custom_call.1} parent=1 // pred_check_branch
      %51 = sbr.rel (0) target = $region17
    $region16: #{tpu_custom_call.1} parent=1 // pred_region
      %53 = vsyncadd [#allocation9], 0
      %s54 = sshll.u32 %s3, 4
      %s55 = int_to_ptr.hbm [resolvable:$true] %s54
      %s56 = sshll.u32 [#allocation8], 4
      %s57 = int_to_ptr.vmem [resolvable:$true] %s56
      %62 = dma.hbm_to_vmem [thread:$0]  %s55, 80, %s57, [#allocation9], 16, 16, 1
    $region17: #{tpu_custom_call.1} parent=1 // pred_fallthru
      _
    // Predicated region
    $region18: #{tpu_custom_call.1} parent=1 // pred_check
      _
    $region19: #{tpu_custom_call.1} parent=1 // pred_check_branch
      %64 = sbr.rel (0) target = $region21
    $region20: #{tpu_custom_call.1} parent=1 // pred_region
      %66 = dma.done [#allocation3], 128
    $region21: #{tpu_custom_call.1} parent=1 // pred_fallthru
      _
    // Predicated region
    $region22: #{tpu_custom_call.1} parent=1 // pred_check
      _
    $region23: #{tpu_custom_call.1} parent=1 // pred_check_branch
      %68 = sbr.rel (0) target = $region25
    $region24: #{tpu_custom_call.1} parent=1 // pred_region
      %70 = dma.done [#allocation6], 2048
    $region25: #{tpu_custom_call.1} parent=1 // pred_fallthru
      _
    // Predicated region
    $region26: #{tpu_custom_call.1} parent=1 // pred_check
      _
    $region27: #{tpu_custom_call.1} parent=1 // pred_check_branch
      %72 = sbr.rel (0) target = $region29
    $region28: #{tpu_custom_call.1} parent=1 // pred_region
      %74 = dma.done [#allocation6], 8192
    $region29: #{tpu_custom_call.1} parent=1 // pred_fallthru
      _
    // Predicated region
    $region30: #{tpu_custom_call.1} parent=1 // pred_check
      _
    $region31: #{tpu_custom_call.1} parent=1 // pred_check_branch
      %76 = sbr.rel (0) target = $region33
    $region32: #{tpu_custom_call.1} parent=1 // pred_region
      %78 = dma.done [#allocation9], 80
    $region33: #{tpu_custom_call.1} parent=1 // pred_fallthru
      _
    %v79 = vld [vmem:[#allocation2] sm:$0xff]
    %v80 = vld [vmem:[#allocation5] sm:$0xff]
    %v81 = vld [vmem:[#allocation5 + $0x8] sm:$0xff]
    %v82 = vld [vmem:[#allocation5 + $0x10] sm:$0xff]
    %v83 = vld [vmem:[#allocation5 + $0x18] sm:$0xff]
    %v84 = vld [vmem:[#allocation5 + $0x20] sm:$0xff]
    %v85 = vld [vmem:[#allocation5 + $0x28] sm:$0xff]
    %v86 = vld [vmem:[#allocation5 + $0x30] sm:$0xff]
    %v87 = vld [vmem:[#allocation5 + $0x38] sm:$0xff]
    %v88 = vld [vmem:[#allocation5 + $0x40] sm:$0xff]
    %v89 = vld [vmem:[#allocation5 + $0x48] sm:$0xff]
    %v90 = vld [vmem:[#allocation5 + $0x50] sm:$0xff]
    %v91 = vld [vmem:[#allocation5 + $0x58] sm:$0xff]
    %v92 = vld [vmem:[#allocation5 + $0x60] sm:$0xff]
    %v93 = vld [vmem:[#allocation5 + $0x68] sm:$0xff]
    %v94 = vld [vmem:[#allocation5 + $0x70] sm:$0xff]
    %v95 = vld [vmem:[#allocation5 + $0x78] sm:$0xff]
    %v96 = vld [vmem:[#allocation8] sm:$0x1]
    %v98 = vperm.slane %v96, 0
    %100 = vmatpush.msra.mxu0 %v95
    %101 = vmatpush.msra.mxu0 %v94
    %102 = vmatpush.msra.mxu0 %v93
    %103 = vmatpush.msra.mxu0 %v92
    %104 = vmatpush.msra.mxu0 %v91
    %105 = vmatpush.msra.mxu0 %v90
    %106 = vmatpush.msra.mxu0 %v89
    %107 = vmatpush.msra.mxu0 %v88
    %108 = vmatpush.msra.mxu0 %v87
    %109 = vmatpush.msra.mxu0 %v86
    %110 = vmatpush.msra.mxu0 %v85
    %111 = vmatpush.msra.mxu0 %v84
    %112 = vmatpush.msra.mxu0 %v83
    %113 = vmatpush.msra.mxu0 %v82
    %114 = vmatpush.msra.mxu0 %v81
    %115 = vmatpush.msra.mxu0 %v80
    %116 = vmatmul.f32.gmra.mxu0 %v79
    %v117 = vpop.f32.mrf.mxu0
    %v118 = vadd.f32 %v98, %v117
    %119 = vdwg.mxu0
    %v120 = vmax.f32 %v118, 0.0
    %v121 = vld [vmem:[#allocation7] sm:$0xff]
    %v122 = vld [vmem:[#allocation7 + $0x8] sm:$0xff]
    %v123 = vld [vmem:[#allocation7 + $0x10] sm:$0xff]
    %v124 = vld [vmem:[#allocation7 + $0x18] sm:$0xff]
    %v125 = vld [vmem:[#allocation7 + $0x20] sm:$0xff]
    %v126 = vld [vmem:[#allocation7 + $0x28] sm:$0xff]
    %v127 = vld [vmem:[#allocation7 + $0x30] sm:$0xff]
    %v128 = vld [vmem:[#allocation7 + $0x38] sm:$0xff]
    %v129 = vld [vmem:[#allocation7 + $0x40] sm:$0xff]
    %v130 = vld [vmem:[#allocation7 + $0x48] sm:$0xff]
    %v131 = vld [vmem:[#allocation7 + $0x50] sm:$0xff]
    %v132 = vld [vmem:[#allocation7 + $0x58] sm:$0xff]
    %v133 = vld [vmem:[#allocation7 + $0x60] sm:$0xff]
    %v134 = vld [vmem:[#allocation7 + $0x68] sm:$0xff]
    %v135 = vld [vmem:[#allocation7 + $0x70] sm:$0xff]
    %v136 = vld [vmem:[#allocation7 + $0x78] sm:$0xff]
    %s137 = scalar_lea.vmem [#allocation8], 1
    %v138 = vld [vmem:[%s137] sm:$0x1]
    %v140 = vperm.slane %v138, 0
    %142 = vmatpush.msra.mxu0 %v136
    %143 = vmatpush.msra.mxu0 %v135
    %144 = vmatpush.msra.mxu0 %v134
    %145 = vmatpush.msra.mxu0 %v133
    %146 = vmatpush.msra.mxu0 %v132
    %147 = vmatpush.msra.mxu0 %v131
    %148 = vmatpush.msra.mxu0 %v130
    %149 = vmatpush.msra.mxu0 %v129
    %150 = vmatpush.msra.mxu0 %v128
    %151 = vmatpush.msra.mxu0 %v127
    %152 = vmatpush.msra.mxu0 %v126
    %153 = vmatpush.msra.mxu0 %v125
    %154 = vmatpush.msra.mxu0 %v124
    %155 = vmatpush.msra.mxu0 %v123
    %156 = vmatpush.msra.mxu0 %v122
    %157 = vmatpush.msra.mxu0 %v121
    %158 = vmatmul.f32.gmra.mxu0 %v120
    %v159 = vpop.f32.mrf.mxu0
    %v160 = vadd.f32 %v140, %v159
    %161 = vdwg.mxu0
    %v162 = vmax.f32 %v160, 0.0
    %s163 = scalar_lea.vmem [#allocation7], 128
    %v164 = vld [vmem:[%s163] sm:$0xff]
    %v165 = vld [vmem:[%s163 + $0x8] sm:$0xff]
    %v166 = vld [vmem:[%s163 + $0x10] sm:$0xff]
    %v167 = vld [vmem:[%s163 + $0x18] sm:$0xff]
    %v168 = vld [vmem:[%s163 + $0x20] sm:$0xff]
    %v169 = vld [vmem:[%s163 + $0x28] sm:$0xff]
    %v170 = vld [vmem:[%s163 + $0x30] sm:$0xff]
    %v171 = vld [vmem:[%s163 + $0x38] sm:$0xff]
    %v172 = vld [vmem:[%s163 + $0x40] sm:$0xff]
    %v173 = vld [vmem:[%s163 + $0x48] sm:$0xff]
    %v174 = vld [vmem:[%s163 + $0x50] sm:$0xff]
    %v175 = vld [vmem:[%s163 + $0x58] sm:$0xff]
    %v176 = vld [vmem:[%s163 + $0x60] sm:$0xff]
    %v177 = vld [vmem:[%s163 + $0x68] sm:$0xff]
    %v178 = vld [vmem:[%s163 + $0x70] sm:$0xff]
    %v179 = vld [vmem:[%s163 + $0x78] sm:$0xff]
    %s180 = scalar_lea.vmem [#allocation8], 2
    %v181 = vld [vmem:[%s180] sm:$0x1]
    %v183 = vperm.slane %v181, 0
    %185 = vmatpush.msra.mxu0 %v179
    %186 = vmatpush.msra.mxu0 %v178
    %187 = vmatpush.msra.mxu0 %v177
    %188 = vmatpush.msra.mxu0 %v176
    %189 = vmatpush.msra.mxu0 %v175
    %190 = vmatpush.msra.mxu0 %v174
    %191 = vmatpush.msra.mxu0 %v173
    %192 = vmatpush.msra.mxu0 %v172
    %193 = vmatpush.msra.mxu0 %v171
    %194 = vmatpush.msra.mxu0 %v170
    %195 = vmatpush.msra.mxu0 %v169
    %196 = vmatpush.msra.mxu0 %v168
    %197 = vmatpush.msra.mxu0 %v167
    %198 = vmatpush.msra.mxu0 %v166
    %199 = vmatpush.msra.mxu0 %v165
    %200 = vmatpush.msra.mxu0 %v164
    %201 = vmatmul.f32.gmra.mxu0 %v162
    %v202 = vpop.f32.mrf.mxu0
    %v203 = vadd.f32 %v183, %v202
    %204 = vdwg.mxu0
    %v205 = vmax.f32 %v203, 0.0
    %s206 = scalar_lea.vmem [#allocation7], 256
    %v207 = vld [vmem:[%s206] sm:$0xff]
    %v208 = vld [vmem:[%s206 + $0x8] sm:$0xff]
    %v209 = vld [vmem:[%s206 + $0x10] sm:$0xff]
    %v210 = vld [vmem:[%s206 + $0x18] sm:$0xff]
    %v211 = vld [vmem:[%s206 + $0x20] sm:$0xff]
    %v212 = vld [vmem:[%s206 + $0x28] sm:$0xff]
    %v213 = vld [vmem:[%s206 + $0x30] sm:$0xff]
    %v214 = vld [vmem:[%s206 + $0x38] sm:$0xff]
    %v215 = vld [vmem:[%s206 + $0x40] sm:$0xff]
    %v216 = vld [vmem:[%s206 + $0x48] sm:$0xff]
    %v217 = vld [vmem:[%s206 + $0x50] sm:$0xff]
    %v218 = vld [vmem:[%s206 + $0x58] sm:$0xff]
    %v219 = vld [vmem:[%s206 + $0x60] sm:$0xff]
    %v220 = vld [vmem:[%s206 + $0x68] sm:$0xff]
    %v221 = vld [vmem:[%s206 + $0x70] sm:$0xff]
    %v222 = vld [vmem:[%s206 + $0x78] sm:$0xff]
    %s223 = scalar_lea.vmem [#allocation8], 3
    %v224 = vld [vmem:[%s223] sm:$0x1]
    %v226 = vperm.slane %v224, 0
    %228 = vmatpush.msra.mxu0 %v222
    %229 = vmatpush.msra.mxu0 %v221
    %230 = vmatpush.msra.mxu0 %v220
    %231 = vmatpush.msra.mxu0 %v219
    %232 = vmatpush.msra.mxu0 %v218
    %233 = vmatpush.msra.mxu0 %v217
    %234 = vmatpush.msra.mxu0 %v216
    %235 = vmatpush.msra.mxu0 %v215
    %236 = vmatpush.msra.mxu0 %v214
    %237 = vmatpush.msra.mxu0 %v213
    %238 = vmatpush.msra.mxu0 %v212
    %239 = vmatpush.msra.mxu0 %v211
    %240 = vmatpush.msra.mxu0 %v210
    %241 = vmatpush.msra.mxu0 %v209
    %242 = vmatpush.msra.mxu0 %v208
    %243 = vmatpush.msra.mxu0 %v207
    %244 = vmatmul.f32.gmra.mxu0 %v205
    %v245 = vpop.f32.mrf.mxu0
    %v246 = vadd.f32 %v226, %v245
    %247 = vdwg.mxu0
    %v248 = vmax.f32 %v246, 0.0
    %s249 = scalar_lea.vmem [#allocation7], 384
    %v250 = vld [vmem:[%s249] sm:$0xff]
    %v251 = vld [vmem:[%s249 + $0x8] sm:$0xff]
    %v252 = vld [vmem:[%s249 + $0x10] sm:$0xff]
    %v253 = vld [vmem:[%s249 + $0x18] sm:$0xff]
    %v254 = vld [vmem:[%s249 + $0x20] sm:$0xff]
    %v255 = vld [vmem:[%s249 + $0x28] sm:$0xff]
    %v256 = vld [vmem:[%s249 + $0x30] sm:$0xff]
    %v257 = vld [vmem:[%s249 + $0x38] sm:$0xff]
    %v258 = vld [vmem:[%s249 + $0x40] sm:$0xff]
    %v259 = vld [vmem:[%s249 + $0x48] sm:$0xff]
    %v260 = vld [vmem:[%s249 + $0x50] sm:$0xff]
    %v261 = vld [vmem:[%s249 + $0x58] sm:$0xff]
    %v262 = vld [vmem:[%s249 + $0x60] sm:$0xff]
    %v263 = vld [vmem:[%s249 + $0x68] sm:$0xff]
    %v264 = vld [vmem:[%s249 + $0x70] sm:$0xff]
    %v265 = vld [vmem:[%s249 + $0x78] sm:$0xff]
    %s266 = scalar_lea.vmem [#allocation8], 4
    %v267 = vld [vmem:[%s266] sm:$0x1]
    %v269 = vperm.slane %v267, 0
    %271 = vmatpush.msra.mxu0 %v265
    %272 = vmatpush.msra.mxu0 %v264
    %273 = vmatpush.msra.mxu0 %v263
    %274 = vmatpush.msra.mxu0 %v262
    %275 = vmatpush.msra.mxu0 %v261
    %276 = vmatpush.msra.mxu0 %v260
    %277 = vmatpush.msra.mxu0 %v259
    %278 = vmatpush.msra.mxu0 %v258
    %279 = vmatpush.msra.mxu0 %v257
    %280 = vmatpush.msra.mxu0 %v256
    %281 = vmatpush.msra.mxu0 %v255
    %282 = vmatpush.msra.mxu0 %v254
    %283 = vmatpush.msra.mxu0 %v253
    %284 = vmatpush.msra.mxu0 %v252
    %285 = vmatpush.msra.mxu0 %v251
    %286 = vmatpush.msra.mxu0 %v250
    %287 = vmatmul.f32.gmra.mxu0 %v248
    %v288 = vpop.f32.mrf.mxu0
    %v289 = vadd.f32 %v269, %v288
    %290 = vdwg.mxu0
    %291 = vst [vmem:[#allocation10] sm:$0xff] %v289
    // Predicated region
    $region34: #{tpu_custom_call.1} parent=1 // pred_check
      _
    $region35: #{tpu_custom_call.1} parent=1 // pred_check_branch
      %293 = sbr.rel (0) target = $region37
    $region36: #{tpu_custom_call.1} parent=1 // pred_region
      %295 = vsyncadd [#allocation4], 0
      %s297 = sshll.u32 [#allocation10], 4
      %s298 = int_to_ptr.vmem [resolvable:$true] %s297
      %s299 = sshll.u32 %s4, 4
      %s300 = int_to_ptr.hbm [resolvable:$true] %s299
      %302 = dma.vmem_to_hbm [thread:$0]  %s298, 128, %s300, [#allocation4]
    $region37: #{tpu_custom_call.1} parent=1 // pred_fallthru
      _
    // Predicated region
    $region38: #{tpu_custom_call.1} parent=1 // pred_check
      _
    $region39: #{tpu_custom_call.1} parent=1 // pred_check_branch
      %304 = sbr.rel (0) target = $region41
    $region40: #{tpu_custom_call.1} parent=1 // pred_region
      %306 = dma.done [#allocation4], 128
    $region41: #{tpu_custom_call.1} parent=1 // pred_fallthru
      _
    %307 = vsyncpa [#allocation3], 1
    %308 = vsyncpa [#allocation6], 1
    %309 = vsyncpa [#allocation9], 1
    %310 = vsyncpa [#allocation4], 1

</llo_original>
